<compile_context>
chip_gen: v7x
topology: tpu7x:2x2x1
jax: 0.10.0
libtpu: 0.0.40
codegen_flags: <defaults>
</compile_context>

<pallas_src>
import functools

import jax
import jax.numpy as jnp
from jax import lax
from jax.experimental import pallas as pl
from jax.experimental.pallas import tpu as pltpu


def _cdiv(a, b):
    return (a + b - 1) // b


def _clamp_tile(requested, n):
    """Row-tile size: equal to the full dim (any value) or a multiple of 8."""
    if requested >= n:
        return n
    return max(8, (requested // 8) * 8)


def _pooled_kernel(x_ref, v_ref, m_out, l_out, acc_out,
                   m_sc, l_sc, acc_sc, *, n_valid, tile_rows, tiles_per_split):
    """Per-split online-softmax reduction over row tiles of x.

    s2[j] = x[j] . v  (v = W^T @ a2, precomputed; the a1 half cancels exactly).
    Split s accumulates over its row tiles:
        m_s   = max_j s2[j]
        l_s   = sum_j exp(s2[j] - m_s)
        acc_s = sum_j exp(s2[j] - m_s) * x[j]        # (1, in) -- x, not h
    The W projection is applied once after the cross-split combine (kernel 2).
    """
    s = pl.program_id(0)       # reduction split ("parallel": one per TC on v7x)
    i = pl.program_id(1)       # row tile within the split ("arbitrary")

    @pl.when(i == 0)
    def _():
        # Finite sentinel (not -inf) so alpha = exp(m_old - m_new) can never be NaN.
        m_sc[...] = jnp.full_like(m_sc, -1e30)
        l_sc[...] = jnp.zeros_like(l_sc)
        acc_sc[...] = jnp.zeros_like(acc_sc)

    # Global row offsets of this tile.  The index_map clamps over-covered tile
    # ids; rows are computed from the UNCLAMPED id, so such tiles (and the
    # partial boundary tile's out-of-range rows) mask themselves out entirely.
    g = s * tiles_per_split + i
    rows = g * tile_rows + lax.broadcasted_iota(jnp.int32, (tile_rows, 1), 0)
    valid = rows < n_valid

    x = x_ref[...].astype(jnp.float32)
    x = jnp.where(valid, x, 0.0)                           # zero padded/OOB rows

    s2 = jnp.sum(x * v_ref[...], axis=1, keepdims=True)    # (tile_rows, 1) VPU+XLU
    s2 = jnp.where(valid, s2, -1e30)

    m_old = m_sc[...]                                      # (1, 1)
    m_new = jnp.maximum(m_old, jnp.max(s2, axis=0, keepdims=True))
    alpha = jnp.exp(m_old - m_new)
    p = jnp.exp(s2 - m_new)                                # (tile_rows, 1)
    p = jnp.where(valid, p, 0.0)                           # belt-and-braces
    l_sc[...] = alpha * l_sc[...] + jnp.sum(p, axis=0, keepdims=True)
    acc_sc[...] = alpha * acc_sc[...] + jnp.sum(p * x, axis=0, keepdims=True)
    m_sc[...] = m_new

    @pl.when(i == pl.num_programs(1) - 1)
    def _():
        m_out[...] = m_sc[...].reshape(m_out.shape)
        l_out[...] = l_sc[...].reshape(l_out.shape)
        acc_out[...] = acc_sc[...].reshape(acc_out.shape)


def _combine_project_broadcast_kernel(m_ref, l_ref, acc_ref, wt_ref, o_ref):
    """Combine per-split partials, normalize, project through W, broadcast rows."""
    num_splits = m_ref.shape[0]

    m = m_ref[0]                                           # (1, 1)
    for s in range(1, num_splits):                         # static unroll (<=2)
        m = jnp.maximum(m, m_ref[s])

    l = jnp.zeros((1, 1), jnp.float32)
    acc_x = jnp.zeros((1, acc_ref.shape[2]), jnp.float32)
    for s in range(num_splits):
        w = jnp.exp(m_ref[s] - m)                          # (1, 1)
        l = l + w * l_ref[s]
        acc_x = acc_x + w * acc_ref[s]                     # (1, in)

    # Softmax-weighted mean of x rows, then the single tiny W projection.
    pooled_x = acc_x * pl.reciprocal(l, approx=False)      # (1, in)
    pooled_h = jnp.dot(pooled_x, wt_ref[...],
                       preferred_element_type=jnp.float32)  # (1, out)
    o_ref[...] = jnp.broadcast_to(pooled_h, o_ref.shape).astype(o_ref.dtype)


def gat_forward(x, adj, W, a, *, tile_rows=4096, out_tile_rows=8192,
                use_bf16=False, split_reduction=True):
    """x: (N, in), adj: (N, N) [unused by the reference], W: (out, in), a: (1, 2*out)."""
    del adj  # never used by the reference forward pass
    N, in_features = x.shape
    out_features = W.shape[0]

    wt = W.T.astype(jnp.float32)                           # (in, out)
    a_vec = a.reshape(-1).astype(jnp.float32)
    a2 = a_vec[out_features:]                              # (out,); a1 cancels, never used
    # s2[j] = (x[j] @ W^T) . a2 = x[j] . (W^T @ a2): fold W into a once so the
    # streaming kernel never materializes h and runs no per-tile matmul.
    v = (wt @ a2.reshape(out_features, 1)).reshape(1, in_features)

    # x enters the kernel unpadded (feature dim equals the full array dim, rows
    # handled by partial blocks + masking): no wrapper-side materialization in
    # the f32 path, a single direct cast in the bf16 path.
    x_in = x.astype(jnp.bfloat16) if use_bf16 else x.astype(jnp.float32)

    tile_rows = _clamp_tile(tile_rows, N)
    n_tiles = _cdiv(N, tile_rows)
    num_splits = 2 if (split_reduction and n_tiles >= 2) else 1   # v7x: one split per TC
    tiles_per_split = _cdiv(n_tiles, num_splits)

    def x_index_map(s, i):
        g = s * tiles_per_split + i
        return (jnp.minimum(g, n_tiles - 1), 0)   # clamp over-covered tiles (masked in-kernel)

    kernel1 = functools.partial(_pooled_kernel, n_valid=N, tile_rows=tile_rows,
                                tiles_per_split=tiles_per_split)

    # Kernel 1: row-tiled online-softmax reduction -> per-split (m, l, sum p*x).
    m_parts, l_parts, acc_parts = pl.pallas_call(
        kernel1,
        out_shape=(
            jax.ShapeDtypeStruct((num_splits, 1, 1), jnp.float32),
            jax.ShapeDtypeStruct((num_splits, 1, 1), jnp.float32),
            jax.ShapeDtypeStruct((num_splits, 1, in_features), jnp.float32),
        ),
        grid=(num_splits, tiles_per_split),
        in_specs=[
            pl.BlockSpec((tile_rows, in_features), x_index_map),
            pl.BlockSpec((1, in_features), lambda s, i: (0, 0)),
        ],
        out_specs=(
            pl.BlockSpec((1, 1, 1), lambda s, i: (s, 0, 0)),
            pl.BlockSpec((1, 1, 1), lambda s, i: (s, 0, 0)),
            pl.BlockSpec((1, 1, in_features), lambda s, i: (s, 0, 0)),
        ),
        scratch_shapes=[
            pltpu.VMEM((1, 1), jnp.float32),             # running max m
            pltpu.VMEM((1, 1), jnp.float32),             # running denom l
            pltpu.VMEM((1, in_features), jnp.float32),   # running sum of p * x
        ],
        compiler_params=pltpu.CompilerParams(
            dimension_semantics=("parallel", "arbitrary"),
            vmem_limit_bytes=32 * 1024 * 1024,
        ),
    )(x_in, v)

    out_tile_rows = _clamp_tile(out_tile_rows, N)
    n_out_tiles = _cdiv(N, out_tile_rows)

    # Kernel 2: combine split partials, project once through W, broadcast the
    # pooled row to all N rows.  Output is written at its natural (N, out)
    # width -- no 128-padding, no post-slice pass.
    h_prime = pl.pallas_call(
        _combine_project_broadcast_kernel,
        out_shape=jax.ShapeDtypeStruct((N, out_features), jnp.float32),
        grid=(n_out_tiles,),
        in_specs=[
            pl.BlockSpec((num_splits, 1, 1), lambda i: (0, 0, 0)),
            pl.BlockSpec((num_splits, 1, 1), lambda i: (0, 0, 0)),
            pl.BlockSpec((num_splits, 1, in_features), lambda i: (0, 0, 0)),
            pl.BlockSpec((in_features, out_features), lambda i: (0, 0)),
        ],
        out_specs=pl.BlockSpec((out_tile_rows, out_features), lambda i: (i, 0)),
        compiler_params=pltpu.CompilerParams(
            dimension_semantics=("parallel",),
            vmem_limit_bytes=32 * 1024 * 1024,
        ),
    )(m_parts, l_parts, acc_parts, wt)

    return h_prime


def gat_reference(x, W, a):
    """Plain-JAX reference of the full (un-simplified) intended semantics."""
    h = x @ W.T
    out = h.shape[1]
    a_vec = a.reshape(-1)
    s1 = h @ a_vec[:out].reshape(out, 1)      # (N, 1)
    s2 = h @ a_vec[out:].reshape(out, 1)      # (N, 1)
    e = s1 + s2.T                             # (N, N)
    att = jax.nn.softmax(e, axis=1)
    return att @ h


if __name__ == "__main__":
    in_features = 16
    out_features = 32

    key = jax.random.PRNGKey(0)
    kx, kadj, kw, ka, kx2 = jax.random.split(key, 5)

    W = 0.1 * jax.random.normal(kw, (out_features, in_features), dtype=jnp.float32)
    a = 0.1 * jax.random.normal(ka, (1, 2 * out_features), dtype=jnp.float32)

    # Case 1: small graph -> single row tile, no reduction split.
    N = 8
    x = jax.random.normal(kx, (N, in_features), dtype=jnp.float32)
    adj = (jax.random.uniform(kadj, (N, N)) > 0.5).astype(jnp.float32)
    h_prime = jax.block_until_ready(gat_forward(x, adj, W, a))
    ref = gat_reference(x, W, a)
    assert h_prime.shape == (N, out_features)
    assert jnp.allclose(h_prime, ref, atol=1e-4, rtol=1e-4)

    # Case 2: N=20 with 8-row tiles -> multi-tile online softmax, 2-way
    # reduction split with per-split partials + combine, and partial boundary
    # blocks (rows not a multiple of the tile) on both kernels.
    N2 = 20
    x2 = jax.random.normal(kx2, (N2, in_features), dtype=jnp.float32)
    adj2 = jnp.ones((N2, N2), dtype=jnp.float32)
    h_prime2 = jax.block_until_ready(
        gat_forward(x2, adj2, W, a, tile_rows=8, out_tile_rows=8))
    ref2 = gat_reference(x2, W, a)
    assert h_prime2.shape == (N2, out_features)
    assert jnp.allclose(h_prime2, ref2, atol=1e-4, rtol=1e-4)

    # Case 3: bf16 x-stream smoke test (halves the dominant HBM read); bf16
    # numerics, so compare loosely.
    h_prime3 = jax.block_until_ready(gat_forward(x2, adj2, W, a, use_bf16=True))
    assert h_prime3.shape == (N2, out_features)
    assert jnp.allclose(h_prime3, ref2, atol=5e-2, rtol=5e-2)

    print("KERNEL_OK")
</pallas_src>

<mosaic_0001>
module attributes {stable_mosaic.version = 11 : i64} {
  func.func @_pooled_kernel(%arg0: i32, %arg1: i32, %arg2: memref<8x16xf32, #tpu.memory_space<vmem>>, %arg3: memref<1x16xf32, #tpu.memory_space<vmem>>, %arg4: memref<1x1x1xf32, #tpu.memory_space<vmem>>, %arg5: memref<1x1x1xf32, #tpu.memory_space<vmem>>, %arg6: memref<1x1x16xf32, #tpu.memory_space<vmem>>, %arg7: memref<1x1xf32, #tpu.memory_space<vmem>>, %arg8: memref<1x1xf32, #tpu.memory_space<vmem>>, %arg9: memref<1x16xf32, #tpu.memory_space<vmem>>) attributes {dimension_semantics = [#tpu.dimension_semantics<parallel>, #tpu.dimension_semantics<arbitrary>], iteration_bounds = array<i64: 1, 1>, scalar_prefetch = 0 : i64, scratch_operands = 3 : i64, tpu.core_type = #tpu.core_type<tc>, window_params = [{transform_indices = @transform_0, window_bounds = array<i64: 8, 16>}, {pipeline_mode = #tpu.pipeline_mode<synchronous>, transform_indices = @transform_1, window_bounds = array<i64: 1, 16>}, {transform_indices = @transform_2, window_bounds = array<i64: 1, 1, 1>}, {transform_indices = @transform_3, window_bounds = array<i64: 1, 1, 1>}, {transform_indices = @transform_4, window_bounds = array<i64: 1, 1, 16>}]} {
    %c0_i32 = arith.constant 0 : i32
    %0 = arith.cmpi eq, %arg1, %c0_i32 : i32
    %1 = arith.extui %0 : i1 to i32
    %c0_i32_0 = arith.constant 0 : i32
    %2 = arith.cmpi ne, %1, %c0_i32_0 : i32
    scf.if %2 {
      %cst_25 = arith.constant -1.000000e+30 : f32
      %53 = vector.broadcast %cst_25 : f32 to vector<1x1xf32>
      %c0_26 = arith.constant 0 : index
      %c0_27 = arith.constant 0 : index
      %54 = vector.load %arg7[%c0_26, %c0_27] : memref<1x1xf32, #tpu.memory_space<vmem>>, vector<1x1xf32>
      tpu.vector_store %arg7[%c0_26, %c0_27], %53 {strides = array<i32>} : memref<1x1xf32, #tpu.memory_space<vmem>>, vector<1x1xf32>,
      %cst_28 = arith.constant 0.000000e+00 : f32
      %55 = vector.broadcast %cst_28 : f32 to vector<1x1xf32>
      %c0_29 = arith.constant 0 : index
      %c0_30 = arith.constant 0 : index
      %56 = vector.load %arg8[%c0_29, %c0_30] : memref<1x1xf32, #tpu.memory_space<vmem>>, vector<1x1xf32>
      tpu.vector_store %arg8[%c0_29, %c0_30], %55 {strides = array<i32>} : memref<1x1xf32, #tpu.memory_space<vmem>>, vector<1x1xf32>,
      %cst_31 = arith.constant 0.000000e+00 : f32
      %57 = vector.broadcast %cst_31 : f32 to vector<1x16xf32>
      %c0_32 = arith.constant 0 : index
      %c0_33 = arith.constant 0 : index
      %58 = vector.load %arg9[%c0_32, %c0_33] : memref<1x16xf32, #tpu.memory_space<vmem>>, vector<1x16xf32>
      tpu.vector_store %arg9[%c0_32, %c0_33], %57 {strides = array<i32>} : memref<1x16xf32, #tpu.memory_space<vmem>>, vector<1x16xf32>,
    } else {
    }
    %c1_i32 = arith.constant 1 : i32
    %3 = arith.muli %arg0, %c1_i32 : i32
    %4 = arith.addi %3, %arg1 : i32
    %c8_i32 = arith.constant 8 : i32
    %5 = arith.muli %4, %c8_i32 : i32
    %6 = tpu.iota {dimensions = array<i32: 0>} : vector<8x1xi32>
    %7 = vector.broadcast %5 : i32 to vector<8x1xi32>
    %8 = arith.addi %7, %6 : vector<8x1xi32>
    %c8_i32_1 = arith.constant 8 : i32
    %9 = vector.broadcast %c8_i32_1 : i32 to vector<8x1xi32>
    %10 = arith.cmpi slt, %8, %9 : vector<8x1xi32>
    %c0 = arith.constant 0 : index
    %c0_2 = arith.constant 0 : index
    %11 = vector.load %arg2[%c0, %c0_2] : memref<8x16xf32, #tpu.memory_space<vmem>>, vector<8x16xf32>
    %cst = arith.constant 0.000000e+00 : f32
    %12 = vector.shape_cast %10 : vector<8x1xi1> to vector<8x1xi1>
    %13 = vector.broadcast %12 : vector<8x1xi1> to vector<8x16xi1>
    %14 = vector.broadcast %cst : f32 to vector<8x16xf32>
    %15 = arith.select %13, %11, %14 : vector<8x16xi1>, vector<8x16xf32>
    %c0_3 = arith.constant 0 : index
    %c0_4 = arith.constant 0 : index
    %16 = vector.load %arg3[%c0_3, %c0_4] : memref<1x16xf32, #tpu.memory_space<vmem>>, vector<1x16xf32>
    %17 = vector.broadcast %16 : vector<1x16xf32> to vector<8x16xf32>
    %18 = arith.mulf %15, %17 : vector<8x16xf32>
    %cst_5 = arith.constant dense<0.000000e+00> : vector<8xf32>
    %19 = vector.multi_reduction <add>, %18, %cst_5 [1] : vector<8x16xf32> to vector<8xf32>
    %20 = vector.shape_cast %19 : vector<8xf32> to vector<8x1xf32>
    %cst_6 = arith.constant -1.000000e+30 : f32
    %21 = vector.broadcast %cst_6 : f32 to vector<8x1xf32>
    %22 = arith.select %10, %20, %21 : vector<8x1xi1>, vector<8x1xf32>
    %c0_7 = arith.constant 0 : index
    %c0_8 = arith.constant 0 : index
    %23 = vector.load %arg7[%c0_7, %c0_8] : memref<1x1xf32, #tpu.memory_space<vmem>>, vector<1x1xf32>
    %cst_9 = arith.constant dense<0xFF800000> : vector<1xf32>
    %24 = vector.multi_reduction <maximumf>, %22, %cst_9 [0] : vector<8x1xf32> to vector<1xf32>
    %25 = vector.shape_cast %24 : vector<1xf32> to vector<1x1xf32>
    %26 = arith.maximumf %23, %25 : vector<1x1xf32>
    %27 = arith.subf %23, %26 : vector<1x1xf32>
    %28 = math.exp %27 : vector<1x1xf32>
    %29 = vector.broadcast %26 : vector<1x1xf32> to vector<8x1xf32>
    %30 = arith.subf %22, %29 : vector<8x1xf32>
    %31 = math.exp %30 : vector<8x1xf32>
    %cst_10 = arith.constant 0.000000e+00 : f32
    %32 = vector.broadcast %cst_10 : f32 to vector<8x1xf32>
    %33 = arith.select %10, %31, %32 : vector<8x1xi1>, vector<8x1xf32>
    %c0_11 = arith.constant 0 : index
    %c0_12 = arith.constant 0 : index
    %34 = vector.load %arg8[%c0_11, %c0_12] : memref<1x1xf32, #tpu.memory_space<vmem>>, vector<1x1xf32>
    %35 = arith.mulf %28, %34 : vector<1x1xf32>
    %cst_13 = arith.constant dense<0.000000e+00> : vector<1xf32>
    %36 = vector.multi_reduction <add>, %33, %cst_13 [0] : vector<8x1xf32> to vector<1xf32>
    %37 = vector.shape_cast %36 : vector<1xf32> to vector<1x1xf32>
    %38 = arith.addf %35, %37 : vector<1x1xf32>
    %c0_14 = arith.constant 0 : index
    %c0_15 = arith.constant 0 : index
    %39 = vector.load %arg8[%c0_14, %c0_15] : memref<1x1xf32, #tpu.memory_space<vmem>>, vector<1x1xf32>
    tpu.vector_store %arg8[%c0_14, %c0_15], %38 {strides = array<i32>} : memref<1x1xf32, #tpu.memory_space<vmem>>, vector<1x1xf32>,
    %c0_16 = arith.constant 0 : index
    %c0_17 = arith.constant 0 : index
    %40 = vector.load %arg9[%c0_16, %c0_17] : memref<1x16xf32, #tpu.memory_space<vmem>>, vector<1x16xf32>
    %41 = vector.broadcast %28 : vector<1x1xf32> to vector<1x16xf32>
    %42 = arith.mulf %41, %40 : vector<1x16xf32>
    %43 = vector.broadcast %33 : vector<8x1xf32> to vector<8x16xf32>
    %44 = arith.mulf %43, %15 : vector<8x16xf32>
    %cst_18 = arith.constant dense<0.000000e+00> : vector<16xf32>
    %45 = vector.multi_reduction <add>, %44, %cst_18 [0] : vector<8x16xf32> to vector<16xf32>
    %46 = vector.shape_cast %45 : vector<16xf32> to vector<1x16xf32>
    %47 = arith.addf %42, %46 : vector<1x16xf32>
    %c0_19 = arith.constant 0 : index
    %c0_20 = arith.constant 0 : index
    %48 = vector.load %arg9[%c0_19, %c0_20] : memref<1x16xf32, #tpu.memory_space<vmem>>, vector<1x16xf32>
    tpu.vector_store %arg9[%c0_19, %c0_20], %47 {strides = array<i32>} : memref<1x16xf32, #tpu.memory_space<vmem>>, vector<1x16xf32>,
    %c0_21 = arith.constant 0 : index
    %c0_22 = arith.constant 0 : index
    %49 = vector.load %arg7[%c0_21, %c0_22] : memref<1x1xf32, #tpu.memory_space<vmem>>, vector<1x1xf32>
    tpu.vector_store %arg7[%c0_21, %c0_22], %26 {strides = array<i32>} : memref<1x1xf32, #tpu.memory_space<vmem>>, vector<1x1xf32>,
    %c0_i32_23 = arith.constant 0 : i32
    %50 = arith.cmpi eq, %arg1, %c0_i32_23 : i32
    %51 = arith.extui %50 : i1 to i32
    %c0_i32_24 = arith.constant 0 : i32
    %52 = arith.cmpi ne, %51, %c0_i32_24 : i32
    scf.if %52 {
      %c0_25 = arith.constant 0 : index
      %c0_26 = arith.constant 0 : index
      %53 = vector.load %arg7[%c0_25, %c0_26] : memref<1x1xf32, #tpu.memory_space<vmem>>, vector<1x1xf32>
      %54 = vector.shape_cast %53 : vector<1x1xf32> to vector<1x1x1xf32>
      %c0_27 = arith.constant 0 : index
      %c0_28 = arith.constant 0 : index
      %c0_29 = arith.constant 0 : index
      %55 = vector.load %arg4[%c0_27, %c0_28, %c0_29] : memref<1x1x1xf32, #tpu.memory_space<vmem>>, vector<1x1x1xf32>
      tpu.vector_store %arg4[%c0_27, %c0_28, %c0_29], %54 {strides = array<i32>} : memref<1x1x1xf32, #tpu.memory_space<vmem>>, vector<1x1x1xf32>,
      %c0_30 = arith.constant 0 : index
      %c0_31 = arith.constant 0 : index
      %56 = vector.load %arg8[%c0_30, %c0_31] : memref<1x1xf32, #tpu.memory_space<vmem>>, vector<1x1xf32>
      %57 = vector.shape_cast %56 : vector<1x1xf32> to vector<1x1x1xf32>
      %c0_32 = arith.constant 0 : index
      %c0_33 = arith.constant 0 : index
      %c0_34 = arith.constant 0 : index
      %58 = vector.load %arg5[%c0_32, %c0_33, %c0_34] : memref<1x1x1xf32, #tpu.memory_space<vmem>>, vector<1x1x1xf32>
      tpu.vector_store %arg5[%c0_32, %c0_33, %c0_34], %57 {strides = array<i32>} : memref<1x1x1xf32, #tpu.memory_space<vmem>>, vector<1x1x1xf32>,
      %c0_35 = arith.constant 0 : index
      %c0_36 = arith.constant 0 : index
      %59 = vector.load %arg9[%c0_35, %c0_36] : memref<1x16xf32, #tpu.memory_space<vmem>>, vector<1x16xf32>
      %60 = vector.shape_cast %59 : vector<1x16xf32> to vector<1x1x16xf32>
      %c0_37 = arith.constant 0 : index
      %c0_38 = arith.constant 0 : index
      %c0_39 = arith.constant 0 : index
      %61 = vector.load %arg6[%c0_37, %c0_38, %c0_39] : memref<1x1x16xf32, #tpu.memory_space<vmem>>, vector<1x1x16xf32>
      tpu.vector_store %arg6[%c0_37, %c0_38, %c0_39], %60 {strides = array<i32>} : memref<1x1x16xf32, #tpu.memory_space<vmem>>, vector<1x1x16xf32>,
    } else {
    }
    return
  }
  func.func @transform_0(%arg0: i32, %arg1: i32) -> (i32, i32) {
    %c1_i32 = arith.constant 1 : i32
    %0 = arith.muli %arg0, %c1_i32 : i32
    %1 = arith.addi %0, %arg1 : i32
    %c0_i32 = arith.constant 0 : i32
    %2 = arith.minsi %1, %c0_i32 : i32
    %c0_i32_0 = arith.constant 0 : i32
    %c0_i32_1 = arith.constant 0 : i32
    return %2, %c0_i32_0 : i32, i32
  }
  func.func @transform_1(%arg0: i32, %arg1: i32) -> (i32, i32) {
    %c0_i32 = arith.constant 0 : i32
    %c0_i32_0 = arith.constant 0 : i32
    %c0_i32_1 = arith.constant 0 : i32
    return %c0_i32, %c0_i32_0 : i32, i32
  }
  func.func @transform_2(%arg0: i32, %arg1: i32) -> (i32, i32, i32) {
    %c0_i32 = arith.constant 0 : i32
    %c0_i32_0 = arith.constant 0 : i32
    %c0_i32_1 = arith.constant 0 : i32
    return %arg0, %c0_i32, %c0_i32_0 : i32, i32, i32
  }
  func.func @transform_3(%arg0: i32, %arg1: i32) -> (i32, i32, i32) {
    %c0_i32 = arith.constant 0 : i32
    %c0_i32_0 = arith.constant 0 : i32
    %c0_i32_1 = arith.constant 0 : i32
    return %arg0, %c0_i32, %c0_i32_0 : i32, i32, i32
  }
  func.func @transform_4(%arg0: i32, %arg1: i32) -> (i32, i32, i32) {
    %c0_i32 = arith.constant 0 : i32
    %c0_i32_0 = arith.constant 0 : i32
    %c0_i32_1 = arith.constant 0 : i32
    return %arg0, %c0_i32, %c0_i32_0 : i32, i32, i32
  }
}

</mosaic_0001>

<llo_original>
// kernel: tpu_custom_call.1
$region0: #{tpu_custom_call.1}
  #allocation0 [shape = 'u32[]', space=smem, size = 0x4, offset = 0x4, fixed_abs, tag = 'smem constant byte address 0x4 - core index']
  #allocation1 [shape = 'u32[144,128]{1,0:T(1,128)}', space=vmem, size = 0x12000, scoped, tag = 'internal scratch']
  #allocation2 [shape = 'f32[1,1]{1,0:T(1,128)}', space=vmem, size = 0x200, scoped, tag = 'scratch operand']
  #allocation3 [shape = 'f32[1,1]{1,0:T(1,128)}', space=vmem, size = 0x200, scoped, tag = 'scratch operand']
  #allocation4 [shape = 'f32[1,16]{1,0:T(1,128)}', space=vmem, size = 0x200, scoped, tag = 'scratch operand']
  %s0 = inlined_call_operand.hbm [shape: f32[8,16], index: 0, kind: input, shape index: {}]
  %s1 = inlined_call_operand.vmem [shape: f32[1,16], index: 1, kind: input, shape index: {}]
  %s2 = inlined_call_operand.hbm [shape: f32[1,1,1], index: 2, kind: output, shape index: {0}]
  %s3 = inlined_call_operand.hbm [shape: f32[1,1,1], index: 3, kind: output, shape index: {1}]
  %s4 = inlined_call_operand.hbm [shape: f32[1,1,16], index: 4, kind: output, shape index: {2}]
  %5 = xla_tuple %s2, %s3, %s4
  %s6 = sld [smem:[#allocation0]]
  $region46: #{tpu_custom_call.1} parent=0
    _
  %s8 = ssub.s32 1, %s6
  %s9 = scalar_select 0, %s8, %s6
  $region1: #{tpu_custom_call.1} parent=0
    #allocation5 [shape = 'u8[4096]{0}', space=vmem, size = 0x1000, scoped, tag = 'input window, operand 0, single buffered']
    #allocation6 [shape = 's32[1]{0}', space=sflag, size = 0x4, scoped, tag = 'scoped memory for tpu_custom_call.1']
    #allocation7 [shape = 's32[1]{0}', space=sflag, size = 0x4, scoped, tag = 'scoped memory for tpu_custom_call.1']
    #allocation8 [shape = 'u8[512]{0}', space=vmem, size = 0x400, scoped, tag = 'output window, operand 0, single buffered']
    #allocation9 [shape = 'u8[512]{0}', space=vmem, size = 0x400, scoped, tag = 'output window, operand 1, single buffered']
    #allocation10 [shape = 's32[1]{0}', space=sflag, size = 0x4, scoped, tag = 'scoped memory for tpu_custom_call.1']
    #allocation11 [shape = 'u8[512]{0}', space=vmem, size = 0x400, scoped, tag = 'output window, operand 2, single buffered']
    %10 = vsyncpa [#allocation6], 0
    %11 = vsyncpa [#allocation7], 0
    %12 = vsyncpa [#allocation10], 0
    // Predicated region
    $region2: #{tpu_custom_call.1} parent=1 // pred_check
      _
    $region3: #{tpu_custom_call.1} parent=1 // pred_check_branch
      %14 = sbr.rel (0) target = $region5
    $region4: #{tpu_custom_call.1} parent=1 // pred_region
      %s15 = sadd.s32 0, 0
      %p16 = scmp.lt.s32.totalorder %s15, 0
      %s17 = scalar_select %p16, %s15, 0
      %s19 = ssub.s32 128, 128
      %20 = vsyncadd [#allocation6], %s19
      %s21 = smul.addr %s17, 128
      %s22 = scalar_lea.hbm %s0, %s21
      %s24 = sshll.u32 [#allocation5], 4
      %s25 = int_to_ptr.vmem [resolvable:$true] %s24
      %27 = dma.hbm_to_vmem [thread:$0]  %s22, 128, %s25, [#allocation6]
    $region5: #{tpu_custom_call.1} parent=1 // pred_fallthru
      _
    // Predicated region
    $region6: #{tpu_custom_call.1} parent=1 // pred_check
      _
    $region7: #{tpu_custom_call.1} parent=1 // pred_check_branch
      %29 = sbr.rel (0) target = $region9
    $region8: #{tpu_custom_call.1} parent=1 // pred_region
      _
    $region9: #{tpu_custom_call.1} parent=1 // pred_fallthru
      _
    // Predicated region
    $region10: #{tpu_custom_call.1} parent=1 // pred_check
      _
    $region11: #{tpu_custom_call.1} parent=1 // pred_check_branch
      %31 = sbr.rel (0) target = $region13
    $region12: #{tpu_custom_call.1} parent=1 // pred_region
      %32 = dma.done [#allocation6], 128
    $region13: #{tpu_custom_call.1} parent=1 // pred_fallthru
      _
    %s33 = sadd.s32 0, 0
    %p34 = scmp.lt.s32.totalorder %s33, 0
    %s35 = scalar_select %p34, %s33, 0
    %p36 = scmp.eq.s32.totalorder 0, 0
    // Predicated region
    $region14: #{tpu_custom_call.1} parent=1 // pred_check
      %p37 = pneg %p36
    $region15: #{tpu_custom_call.1} parent=1 // pred_check_branch
      %39 = sbr.rel (%p37) target = $region17
    $region16: #{tpu_custom_call.1} parent=1 // pred_region
      %vm40 = vcmask 0
      %41 = vst.msk [vmem:[#allocation2] sm:$0x1] %vm40, -1e+30
      %42 = vst.msk [vmem:[#allocation3] sm:$0x1] %vm40, 0.0
      %vm43 = vcmask 122880
      %44 = vst.msk [vmem:[#allocation4] sm:$0x1] %vm43, 0.0
    $region17: #{tpu_custom_call.1} parent=1 // pred_fallthru
      _
    %s45 = sadd.s32 0, 0
    %s46 = smul.u32 %s45, 8
    %v47 = vlaneseq
    %v48 = vshrl.u32 %v47, 7
    %v49 = vstv %s46
    %v50 = vadd.s32 %v49, %v48
    %vm51 = vcmp.lt.s32.totalorder %v50, 8
    %v52 = vld [vmem:[#allocation5] sm:$0xff]
    %v53 = vsel %vm51, 1, 0
    %vm54 = vcmp.eq.s32.totalorder %v53, 1
    %v55 = vsel %vm54, %v52, 0.0
    %v56 = vld [vmem:[%s1] sm:$0x1]
    %v58 = vlaneseq
    %v59 = vshrl.u32 %v58, 7
    %v60 = vsub.s32 0, %v59
    %v61 = vrot.slane %v56, %v60
    %v63 = vmul.f32 %v55, %v61
    %vm64 = vcmask 130048
    %v65 = vsel %vm64, %v63, 0.0
    %66 = vadd.xlane.f32.xlu0 %v65
    %v67 = vpop.xlane.xlu0 %66
    %v68 = vsel %vm51, %v67, -1e+30
    %v69 = vld [vmem:[#allocation2] sm:$0x1]
    %v70 = vrot.slane %v68, 4
    %v71 = vmax.f32 %v68, %v70
    %v72 = vrot.slane %v71, 2
    %v73 = vmax.f32 %v71, %v72
    %v74 = vrot.slane %v73, 1
    %v75 = vmax.f32 %v73, %v74
    %v76 = vmax.f32 %v69, %v75
    %v77 = vsub.f32 %v69, %v76
    %v78 = vmul.f32 %v77, 1.442695
    %v79 = vpow.pop %v78
    %v81 = vlaneseq
    %v82 = vshrl.u32 %v81, 7
    %v83 = vsub.s32 0, %v82
    %v84 = vrot.slane %v76, %v83
    %v86 = vsub.f32 %v68, %v84
    %v87 = vmul.f32 %v86, 1.442695
    %v88 = vpow.pop %v87
    %v89 = vsel %vm51, %v88, 0.0
    %v90 = vld [vmem:[#allocation3] sm:$0x1]
    %v91 = vmul.f32 %v79, %v90
    %vm92 = vcmask 7168
    %v93 = vsel %vm92, %v89, 0.0
    %v94 = vrot.slane %v93, 4
    %v95 = vadd.f32 %v93, %v94
    %v96 = vrot.slane %v95, 2
    %v97 = vadd.f32 %v95, %v96
    %v98 = vrot.slane %v97, 1
    %v99 = vadd.f32 %v97, %v98
    %v100 = vadd.f32 %v91, %v99
    %vm101 = vcmask 0
    %102 = vst.msk [vmem:[#allocation3] sm:$0x1] %vm101, %v100
    %v103 = vld [vmem:[#allocation4] sm:$0x1]
    %105 = vset.pattern.permute.xlu0 0
    %106 = vperm.xlu0 %105, %v79
    %v107 = vpop.permute.xlu0 %106
    %v109 = vlaneseq
    %v110 = vshrl.u32 %v109, 7
    %v111 = vsub.s32 0, %v110
    %v112 = vrot.slane %v107, %v111
    %v113 = vmul.f32 %v112, %v103
    %115 = vset.pattern.permute.xlu0 0
    %116 = vperm.xlu0 %115, %v89
    %v117 = vpop.permute.xlu0 %116
    %v119 = vmul.f32 %v117, %v55
    %v120 = vsel %vm64, %v119, 0.0
    %v121 = vrot.slane %v120, 4
    %v122 = vadd.f32 %v120, %v121
    %v123 = vrot.slane %v122, 2
    %v124 = vadd.f32 %v122, %v123
    %v125 = vrot.slane %v124, 1
    %v126 = vadd.f32 %v124, %v125
    %v127 = vadd.f32 %v113, %v126
    %vm128 = vcmask 122880
    %129 = vst.msk [vmem:[#allocation4] sm:$0x1] %vm128, %v127
    %130 = vst.msk [vmem:[#allocation2] sm:$0x1] %vm101, %v76
    // Predicated region
    $region18: #{tpu_custom_call.1} parent=1 // pred_check
      %p131 = pneg %p36
    $region19: #{tpu_custom_call.1} parent=1 // pred_check_branch
      %133 = sbr.rel (%p131) target = $region21
    $region20: #{tpu_custom_call.1} parent=1 // pred_region
      %v134 = vld [vmem:[#allocation2] sm:$0x1]
      %135 = vst.msk [vmem:[#allocation8] sm:$0x1] %vm101, %v134
      %v136 = vld [vmem:[#allocation3] sm:$0x1]
      %137 = vst.msk [vmem:[#allocation9] sm:$0x1] %vm101, %v136
      %v138 = vld [vmem:[#allocation4] sm:$0x1]
      %139 = vst.msk [vmem:[#allocation11] sm:$0x1] %vm128, %v138
    $region21: #{tpu_custom_call.1} parent=1 // pred_fallthru
      _
    // Predicated region
    $region22: #{tpu_custom_call.1} parent=1 // pred_check
      _
    $region23: #{tpu_custom_call.1} parent=1 // pred_check_branch
      %141 = sbr.rel (0) target = $region25
    $region24: #{tpu_custom_call.1} parent=1 // pred_region
      %s143 = ssub.s32 16, 16
      %144 = vsyncadd [#allocation7], %s143
      %s146 = sshll.u32 [#allocation8], 4
      %s147 = int_to_ptr.vmem [resolvable:$true] %s146
      %149 = dma.vmem_to_hbm [thread:$0]  %s147, 16, %s2, [#allocation7]
    $region25: #{tpu_custom_call.1} parent=1 // pred_fallthru
      _
    // Predicated region
    $region26: #{tpu_custom_call.1} parent=1 // pred_check
      _
    $region27: #{tpu_custom_call.1} parent=1 // pred_check_branch
      %151 = sbr.rel (0) target = $region29
    $region28: #{tpu_custom_call.1} parent=1 // pred_region
      %s153 = ssub.s32 16, 16
      %154 = vsyncadd [#allocation10], %s153
      %s156 = sshll.u32 [#allocation9], 4
      %s157 = int_to_ptr.vmem [resolvable:$true] %s156
      %159 = dma.vmem_to_hbm [thread:$0]  %s157, 16, %s3, [#allocation10]
    $region29: #{tpu_custom_call.1} parent=1 // pred_fallthru
      _
    // Predicated region
    $region30: #{tpu_custom_call.1} parent=1 // pred_check
      _
    $region31: #{tpu_custom_call.1} parent=1 // pred_check_branch
      %161 = sbr.rel (0) target = $region33
    $region32: #{tpu_custom_call.1} parent=1 // pred_region
      %s163 = ssub.s32 16, 16
      %164 = vsyncadd [#allocation10], %s163
      %s166 = sshll.u32 [#allocation11], 4
      %s167 = int_to_ptr.vmem [resolvable:$true] %s166
      %169 = dma.vmem_to_hbm [thread:$0]  %s167, 16, %s4, [#allocation10]
    $region33: #{tpu_custom_call.1} parent=1 // pred_fallthru
      _
    // Predicated region
    $region34: #{tpu_custom_call.1} parent=1 // pred_check
      _
    $region35: #{tpu_custom_call.1} parent=1 // pred_check_branch
      %171 = sbr.rel (0) target = $region37
    $region36: #{tpu_custom_call.1} parent=1 // pred_region
      %172 = dma.done [#allocation7], 16
    $region37: #{tpu_custom_call.1} parent=1 // pred_fallthru
      _
    // Predicated region
    $region38: #{tpu_custom_call.1} parent=1 // pred_check
      _
    $region39: #{tpu_custom_call.1} parent=1 // pred_check_branch
      %174 = sbr.rel (0) target = $region41
    $region40: #{tpu_custom_call.1} parent=1 // pred_region
      %175 = dma.done [#allocation10], 16
    $region41: #{tpu_custom_call.1} parent=1 // pred_fallthru
      _
    // Predicated region
    $region42: #{tpu_custom_call.1} parent=1 // pred_check
      _
    $region43: #{tpu_custom_call.1} parent=1 // pred_check_branch
      %177 = sbr.rel (0) target = $region45
    $region44: #{tpu_custom_call.1} parent=1 // pred_region
      %178 = dma.done [#allocation10], 16
    $region45: #{tpu_custom_call.1} parent=1 // pred_fallthru
      _
    %179 = vsyncpa [#allocation6], 1
    %180 = vsyncpa [#allocation7], 1
    %181 = vsyncpa [#allocation10], 1

</llo_original>
